<compile_context>
chip_gen: v6e
topology: v6e:2x2x1
jax: 0.10.0
libtpu: 0.0.40
codegen_flags: <defaults>
</compile_context>

<pallas_src>
import functools

import jax
import jax.numpy as jnp
from jax import lax
from jax.experimental import pallas as pl
from jax.experimental.pallas import tpu as pltpu

_LANE = 128


def _round_up(x, m):
    return (x + m - 1) // m * m


def _plan_tiling(B, C, HW, itemsize, target_block_bytes):
    """Choose (TB, hw_tile, hw_padded, num_hw_tiles, acc_w)."""
    # Largest lane-aligned spatial tile with C * hw_tile * itemsize <= target.
    hw_ceil = _round_up(HW, _LANE)
    max_tile = max(_LANE,
                   (target_block_bytes // max(1, C * itemsize)) // _LANE * _LANE)
    hw_tile = min(hw_ceil, max_tile)
    num_hw_tiles = (HW + hw_tile - 1) // hw_tile
    hw_padded = num_hw_tiles * hw_tile

    # Batch blocking: only useful when the whole (padded) spatial extent fits
    # in one tile (small images).  Keep >= 2 parallel grid points when B >= 2
    # so both v7x TensorCores have work.
    TB = 1
    if num_hw_tiles == 1 and B >= 2:
        per_batch_bytes = C * hw_tile * itemsize
        for t in range(B // 2, 0, -1):
            if B % t == 0 and t * per_batch_bytes <= target_block_bytes:
                TB = t
                break

    # Fixed accumulator width, decoupled from hw_tile.
    acc_w = _LANE
    for w in (512, 256, 128):
        if hw_tile % w == 0:
            acc_w = w
            break
    return TB, hw_tile, hw_padded, num_hw_tiles, acc_w


def _channel_attention_kernel(x_ref, w1t_ref, b1_ref, w2t_ref, b2_ref, o_ref,
                              acc_sum, acc_max, *, inv_hw, hw_real, hw_tile,
                              acc_w, needs_mask):
    # x_ref  : (TB, C, hw_tile)  native dtype -- one batch block, one HW tile
    # w1t_ref: (C, Cr) f32   (center tap of conv1, transposed)
    # b1_ref : (1, Cr) f32
    # w2t_ref: (Cr, C) f32   (center tap of conv2, transposed)
    # b2_ref : (1, C)  f32
    # o_ref  : (1, TB, C) x.dtype             -- resident across the HW axis
    # acc_sum: (TB, C, acc_w) f32 VMEM scratch
    # acc_max: (TB, C, acc_w) input-dtype VMEM scratch (max is exact)
    k = pl.program_id(1)
    n_slices = hw_tile // acc_w

    @pl.when(k == 0)
    def _init():
        acc_sum[...] = jnp.zeros(acc_sum.shape, acc_sum.dtype)
        acc_max[...] = jnp.full(acc_max.shape, -jnp.inf, acc_max.dtype)

    # Elementwise (VPU) accumulation over lane-aligned slices of the tile.
    # The accumulators have fixed width acc_w, independent of hw_tile.
    def accumulate(s):
        start = s * acc_w
        if not isinstance(start, int):
            start = pl.multiple_of(start, acc_w)
        sl = x_ref[:, :, pl.ds(start, acc_w)]                  # (TB, C, acc_w)
        acc_sum[...] = acc_sum[...] + sl.astype(jnp.float32)
        if needs_mask:
            # Zero padding is exact for the sum path; mask it with -inf for max.
            lane = lax.broadcasted_iota(jnp.int32, sl.shape, 2)
            valid = (k * hw_tile + start + lane) < hw_real
            slm = jnp.where(valid, sl, jnp.full_like(sl, -jnp.inf))
        else:
            slm = sl
        acc_max[...] = jnp.maximum(acc_max[...], slm.astype(acc_max.dtype))

    if n_slices <= 8:
        for s in range(n_slices):                              # static unroll
            accumulate(s)
    else:
        def _body(s, carry):
            accumulate(s)
            return carry
        lax.fori_loop(0, n_slices, _body, 0)

    @pl.when(k == pl.num_programs(1) - 1)
    def _finalize():
        # Single cross-lane (XLU) reduction per pool, only here.
        avg = jnp.sum(acc_sum[...], axis=-1) * inv_hw                 # (TB, C)
        mx = jnp.max(acc_max[...].astype(jnp.float32), axis=-1)       # (TB, C)

        def fc(p):  # center-tap conv stack == dense layer on the pooled vector
            h = jnp.dot(p, w1t_ref[...],
                        preferred_element_type=jnp.float32) + b1_ref[...]
            h = jnp.maximum(h, 0.0)                                    # ReLU
            return jnp.dot(h, w2t_ref[...],
                           preferred_element_type=jnp.float32) + b2_ref[...]

        logits = fc(avg) + fc(mx)                                      # (TB, C)
        gate = pl.reciprocal(1.0 + jnp.exp(-logits))                   # sigmoid
        o_ref[0] = gate.astype(o_ref.dtype)                            # lane-dense store


def channel_attention(x, w1, b1, w2, b2, *, target_block_bytes=4 << 20):
    """x: (B, C, H, W). w1: (Cr, C, 3, 3), b1: (Cr,), w2: (C, Cr, 3, 3), b2: (C,).

    Returns (B, C, 1, 1) in x.dtype, matching the PyTorch module.
    """
    B, C, H, W = x.shape
    Cr = w1.shape[0]
    HW = H * W
    itemsize = jnp.dtype(x.dtype).itemsize

    TB, hw_tile, hw_padded, num_hw_tiles, acc_w = _plan_tiling(
        B, C, HW, itemsize, target_block_bytes)
    needs_mask = hw_padded != HW

    # Free contiguous reshape; NO dtype cast here (x is DMA'd in native dtype).
    x_flat = x.reshape(B, C, HW)
    if needs_mask:
        # Zero pad: exact for the mean (divides by real HW); the max path masks
        # the padded region with -inf inside the kernel.
        x_flat = jnp.pad(x_flat, ((0, 0), (0, 0), (0, hw_padded - HW)))

    # Center tap of each 3x3 conv (exact on a zero-padded 1x1 map), laid out
    # so the finalize matmuls are plain (TB, C) @ (C, Cr) / (TB, Cr) @ (Cr, C).
    w1t = w1[:, :, 1, 1].T.astype(jnp.float32)          # (C, Cr)
    w2t = w2[:, :, 1, 1].T.astype(jnp.float32)          # (Cr, C)
    b1r = b1.reshape(1, Cr).astype(jnp.float32)
    b2r = b2.reshape(1, C).astype(jnp.float32)

    acc_max_dtype = x.dtype if jnp.issubdtype(x.dtype, jnp.floating) else jnp.float32

    kernel = functools.partial(
        _channel_attention_kernel,
        inv_hw=1.0 / float(HW), hw_real=HW, hw_tile=hw_tile,
        acc_w=acc_w, needs_mask=needs_mask)

    num_b_blocks = B // TB

    grid_spec = pltpu.PrefetchScalarGridSpec(
        num_scalar_prefetch=0,
        grid=(num_b_blocks, num_hw_tiles),               # (parallel, reduction)
        in_specs=[
            pl.BlockSpec((TB, C, hw_tile), lambda b, k: (b, 0, k)),
            pl.BlockSpec((C, Cr), lambda b, k: (0, 0)),
            pl.BlockSpec((1, Cr), lambda b, k: (0, 0)),
            pl.BlockSpec((Cr, C), lambda b, k: (0, 0)),
            pl.BlockSpec((1, C), lambda b, k: (0, 0)),
        ],
        out_specs=pl.BlockSpec((1, TB, C), lambda b, k: (b, 0, 0)),
        scratch_shapes=[
            pltpu.VMEM((TB, C, acc_w), jnp.float32),     # running sum (f32)
            pltpu.VMEM((TB, C, acc_w), acc_max_dtype),   # running max (exact in input dtype)
        ],
    )

    # Explicit VMEM budget: double-buffered input block + accumulators +
    # double-buffered small operands, with headroom.
    in_block_bytes = TB * C * hw_tile * itemsize
    acc_bytes = TB * C * acc_w * (4 + jnp.dtype(acc_max_dtype).itemsize)
    param_bytes = 4 * (2 * C * Cr + C + Cr)
    out_block_bytes = TB * C * itemsize
    budget = (2 * in_block_bytes + acc_bytes
              + 2 * (param_bytes + out_block_bytes) + (2 << 20))
    vmem_limit = int(min(max(budget, 16 << 20), 48 << 20))

    cost = pl.CostEstimate(
        flops=2 * B * C * HW + B * 2 * 2 * (2 * C * Cr),
        transcendentals=B * C,
        bytes_accessed=B * C * hw_padded * itemsize + B * C * itemsize
                       + 4 * (2 * Cr * C + Cr + C),
    )

    out = pl.pallas_call(
        kernel,
        out_shape=jax.ShapeDtypeStruct((num_b_blocks, TB, C), x.dtype),
        grid_spec=grid_spec,
        compiler_params=pltpu.CompilerParams(
            dimension_semantics=("parallel", "arbitrary"),
            vmem_limit_bytes=vmem_limit),
        cost_estimate=cost,
    )(x_flat, w1t, b1r, w2t, b2r)

    return out.reshape(B, C, 1, 1)


if __name__ == "__main__":
    # Module config: channel divisible by reduction=16.
    B, C, H, W = 2, 32, 16, 16
    reduction = 16
    Cr = C // reduction

    key = jax.random.PRNGKey(0)
    kx, k1, k2, k3, k4 = jax.random.split(key, 5)

    x = jax.random.normal(kx, (B, C, H, W), dtype=jnp.float32)

    # Deterministic synthetic parameters (Conv2d weight/bias shapes from __init__).
    w1 = 0.1 * jax.random.normal(k1, (Cr, C, 3, 3), dtype=jnp.float32)
    b1 = 0.1 * jax.random.normal(k2, (Cr,), dtype=jnp.float32)
    w2 = 0.1 * jax.random.normal(k3, (C, Cr, 3, 3), dtype=jnp.float32)
    b2 = 0.1 * jax.random.normal(k4, (C,), dtype=jnp.float32)

    out = channel_attention(x, w1, b1, w2, b2)
    out = jax.block_until_ready(out)

    # Pure-JAX reference (same center-tap math as the PyTorch module).
    avg = jnp.mean(x, axis=(2, 3))
    mx = jnp.max(x, axis=(2, 3))
    w1c_, w2c_ = w1[:, :, 1, 1], w2[:, :, 1, 1]
    fc = lambda p: jnp.maximum(p @ w1c_.T + b1, 0.0) @ w2c_.T + b2
    ref = jax.nn.sigmoid(fc(avg) + fc(mx)).reshape(B, C, 1, 1)

    assert out.shape == (B, C, 1, 1)
    assert jnp.allclose(out, ref, atol=1e-5, rtol=1e-5), "mismatch vs reference"
    print("KERNEL_OK")
</pallas_src>

<mosaic_0001>
module attributes {stable_mosaic.version = 11 : i64} {
  func.func @_channel_attention_kernel(%arg0: i32, %arg1: i32, %arg2: memref<1x32x256xf32, #tpu.memory_space<vmem>>, %arg3: memref<32x2xf32, #tpu.memory_space<vmem>>, %arg4: memref<1x2xf32, #tpu.memory_space<vmem>>, %arg5: memref<2x32xf32, #tpu.memory_space<vmem>>, %arg6: memref<1x32xf32, #tpu.memory_space<vmem>>, %arg7: memref<1x1x32xf32, #tpu.memory_space<vmem>>, %arg8: memref<1x32x256xf32, #tpu.memory_space<vmem>>, %arg9: memref<1x32x256xf32, #tpu.memory_space<vmem>>) attributes {dimension_semantics = [#tpu.dimension_semantics<parallel>, #tpu.dimension_semantics<arbitrary>], iteration_bounds = array<i64: 2, 1>, scalar_prefetch = 0 : i64, scratch_operands = 2 : i64, tpu.core_type = #tpu.core_type<tc>, window_params = [{transform_indices = @transform_0, window_bounds = array<i64: 1, 32, 256>}, {pipeline_mode = #tpu.pipeline_mode<synchronous>, transform_indices = @transform_1, window_bounds = array<i64: 32, 2>}, {pipeline_mode = #tpu.pipeline_mode<synchronous>, transform_indices = @transform_2, window_bounds = array<i64: 1, 2>}, {pipeline_mode = #tpu.pipeline_mode<synchronous>, transform_indices = @transform_3, window_bounds = array<i64: 2, 32>}, {pipeline_mode = #tpu.pipeline_mode<synchronous>, transform_indices = @transform_4, window_bounds = array<i64: 1, 32>}, {transform_indices = @transform_5, window_bounds = array<i64: 1, 1, 32>}]} {
    %c0_i32 = arith.constant 0 : i32
    %0 = arith.cmpi eq, %arg1, %c0_i32 : i32
    %1 = arith.extui %0 : i1 to i32
    %c0_i32_0 = arith.constant 0 : i32
    %2 = arith.cmpi ne, %1, %c0_i32_0 : i32
    scf.if %2 {
      %cst = arith.constant 0.000000e+00 : f32
      %13 = vector.broadcast %cst : f32 to vector<1x32x256xf32>
      %c0_17 = arith.constant 0 : index
      %c0_18 = arith.constant 0 : index
      %c0_19 = arith.constant 0 : index
      %14 = vector.load %arg8[%c0_17, %c0_18, %c0_19] : memref<1x32x256xf32, #tpu.memory_space<vmem>>, vector<1x32x256xf32>
      tpu.vector_store %arg8[%c0_17, %c0_18, %c0_19], %13 {strides = array<i32>} : memref<1x32x256xf32, #tpu.memory_space<vmem>>, vector<1x32x256xf32>,
      %cst_20 = arith.constant 0xFF800000 : f32
      %15 = vector.broadcast %cst_20 : f32 to vector<1x32x256xf32>
      %c0_21 = arith.constant 0 : index
      %c0_22 = arith.constant 0 : index
      %c0_23 = arith.constant 0 : index
      %16 = vector.load %arg9[%c0_21, %c0_22, %c0_23] : memref<1x32x256xf32, #tpu.memory_space<vmem>>, vector<1x32x256xf32>
      tpu.vector_store %arg9[%c0_21, %c0_22, %c0_23], %15 {strides = array<i32>} : memref<1x32x256xf32, #tpu.memory_space<vmem>>, vector<1x32x256xf32>,
    } else {
    }
    %c0 = arith.constant 0 : index
    %c0_1 = arith.constant 0 : index
    %c0_2 = arith.constant 0 : index
    %3 = vector.load %arg2[%c0, %c0_1, %c0_2] : memref<1x32x256xf32, #tpu.memory_space<vmem>>, vector<1x32x256xf32>
    %c0_3 = arith.constant 0 : index
    %c0_4 = arith.constant 0 : index
    %c0_5 = arith.constant 0 : index
    %4 = vector.load %arg8[%c0_3, %c0_4, %c0_5] : memref<1x32x256xf32, #tpu.memory_space<vmem>>, vector<1x32x256xf32>
    %5 = arith.addf %4, %3 : vector<1x32x256xf32>
    %c0_6 = arith.constant 0 : index
    %c0_7 = arith.constant 0 : index
    %c0_8 = arith.constant 0 : index
    %6 = vector.load %arg8[%c0_6, %c0_7, %c0_8] : memref<1x32x256xf32, #tpu.memory_space<vmem>>, vector<1x32x256xf32>
    tpu.vector_store %arg8[%c0_6, %c0_7, %c0_8], %5 {strides = array<i32>} : memref<1x32x256xf32, #tpu.memory_space<vmem>>, vector<1x32x256xf32>,
    %c0_9 = arith.constant 0 : index
    %c0_10 = arith.constant 0 : index
    %c0_11 = arith.constant 0 : index
    %7 = vector.load %arg9[%c0_9, %c0_10, %c0_11] : memref<1x32x256xf32, #tpu.memory_space<vmem>>, vector<1x32x256xf32>
    %8 = arith.maximumf %7, %3 : vector<1x32x256xf32>
    %c0_12 = arith.constant 0 : index
    %c0_13 = arith.constant 0 : index
    %c0_14 = arith.constant 0 : index
    %9 = vector.load %arg9[%c0_12, %c0_13, %c0_14] : memref<1x32x256xf32, #tpu.memory_space<vmem>>, vector<1x32x256xf32>
    tpu.vector_store %arg9[%c0_12, %c0_13, %c0_14], %8 {strides = array<i32>} : memref<1x32x256xf32, #tpu.memory_space<vmem>>, vector<1x32x256xf32>,
    %c0_i32_15 = arith.constant 0 : i32
    %10 = arith.cmpi eq, %arg1, %c0_i32_15 : i32
    %11 = arith.extui %10 : i1 to i32
    %c0_i32_16 = arith.constant 0 : i32
    %12 = arith.cmpi ne, %11, %c0_i32_16 : i32
    scf.if %12 {
      %c0_17 = arith.constant 0 : index
      %c0_18 = arith.constant 0 : index
      %c0_19 = arith.constant 0 : index
      %13 = vector.load %arg8[%c0_17, %c0_18, %c0_19] : memref<1x32x256xf32, #tpu.memory_space<vmem>>, vector<1x32x256xf32>
      %cst = arith.constant dense<0.000000e+00> : vector<1x32xf32>
      %14 = vector.multi_reduction <add>, %13, %cst [2] : vector<1x32x256xf32> to vector<1x32xf32>
      %cst_20 = arith.constant 3.906250e-03 : f32
      %15 = vector.broadcast %cst_20 : f32 to vector<1x32xf32>
      %16 = arith.mulf %14, %15 : vector<1x32xf32>
      %c0_21 = arith.constant 0 : index
      %c0_22 = arith.constant 0 : index
      %c0_23 = arith.constant 0 : index
      %17 = vector.load %arg9[%c0_21, %c0_22, %c0_23] : memref<1x32x256xf32, #tpu.memory_space<vmem>>, vector<1x32x256xf32>
      %cst_24 = arith.constant dense<0xFF800000> : vector<1x32xf32>
      %18 = vector.multi_reduction <maximumf>, %17, %cst_24 [2] : vector<1x32x256xf32> to vector<1x32xf32>
      %c0_25 = arith.constant 0 : index
      %c0_26 = arith.constant 0 : index
      %19 = vector.load %arg3[%c0_25, %c0_26] : memref<32x2xf32, #tpu.memory_space<vmem>>, vector<32x2xf32>
      %cst_27 = arith.constant dense<0.000000e+00> : vector<1x2xf32>
      %20 = tpu.matmul %16, %19, %cst_27 {dimension_numbers = #tpu.dot_dimension_numbers<[1], [0], [0], [1], [0, 0, 1, 1], [], []>} : vector<1x32xf32>, vector<32x2xf32>, vector<1x2xf32> -> vector<1x2xf32>
      %c0_28 = arith.constant 0 : index
      %c0_29 = arith.constant 0 : index
      %21 = vector.load %arg4[%c0_28, %c0_29] : memref<1x2xf32, #tpu.memory_space<vmem>>, vector<1x2xf32>
      %22 = arith.addf %20, %21 : vector<1x2xf32>
      %cst_30 = arith.constant 0.000000e+00 : f32
      %23 = vector.broadcast %cst_30 : f32 to vector<1x2xf32>
      %24 = arith.maximumf %22, %23 : vector<1x2xf32>
      %c0_31 = arith.constant 0 : index
      %c0_32 = arith.constant 0 : index
      %25 = vector.load %arg5[%c0_31, %c0_32] : memref<2x32xf32, #tpu.memory_space<vmem>>, vector<2x32xf32>
      %cst_33 = arith.constant dense<0.000000e+00> : vector<1x32xf32>
      %26 = tpu.matmul %24, %25, %cst_33 {dimension_numbers = #tpu.dot_dimension_numbers<[1], [0], [0], [1], [0, 0, 1, 1], [], []>} : vector<1x2xf32>, vector<2x32xf32>, vector<1x32xf32> -> vector<1x32xf32>
      %c0_34 = arith.constant 0 : index
      %c0_35 = arith.constant 0 : index
      %27 = vector.load %arg6[%c0_34, %c0_35] : memref<1x32xf32, #tpu.memory_space<vmem>>, vector<1x32xf32>
      %28 = arith.addf %26, %27 : vector<1x32xf32>
      %c0_36 = arith.constant 0 : index
      %c0_37 = arith.constant 0 : index
      %29 = vector.load %arg3[%c0_36, %c0_37] : memref<32x2xf32, #tpu.memory_space<vmem>>, vector<32x2xf32>
      %cst_38 = arith.constant dense<0.000000e+00> : vector<1x2xf32>
      %30 = tpu.matmul %18, %29, %cst_38 {dimension_numbers = #tpu.dot_dimension_numbers<[1], [0], [0], [1], [0, 0, 1, 1], [], []>} : vector<1x32xf32>, vector<32x2xf32>, vector<1x2xf32> -> vector<1x2xf32>
      %c0_39 = arith.constant 0 : index
      %c0_40 = arith.constant 0 : index
      %31 = vector.load %arg4[%c0_39, %c0_40] : memref<1x2xf32, #tpu.memory_space<vmem>>, vector<1x2xf32>
      %32 = arith.addf %30, %31 : vector<1x2xf32>
      %cst_41 = arith.constant 0.000000e+00 : f32
      %33 = vector.broadcast %cst_41 : f32 to vector<1x2xf32>
      %34 = arith.maximumf %32, %33 : vector<1x2xf32>
      %c0_42 = arith.constant 0 : index
      %c0_43 = arith.constant 0 : index
      %35 = vector.load %arg5[%c0_42, %c0_43] : memref<2x32xf32, #tpu.memory_space<vmem>>, vector<2x32xf32>
      %cst_44 = arith.constant dense<0.000000e+00> : vector<1x32xf32>
      %36 = tpu.matmul %34, %35, %cst_44 {dimension_numbers = #tpu.dot_dimension_numbers<[1], [0], [0], [1], [0, 0, 1, 1], [], []>} : vector<1x2xf32>, vector<2x32xf32>, vector<1x32xf32> -> vector<1x32xf32>
      %c0_45 = arith.constant 0 : index
      %c0_46 = arith.constant 0 : index
      %37 = vector.load %arg6[%c0_45, %c0_46] : memref<1x32xf32, #tpu.memory_space<vmem>>, vector<1x32xf32>
      %38 = arith.addf %36, %37 : vector<1x32xf32>
      %39 = arith.addf %28, %38 : vector<1x32xf32>
      %cst_47 = arith.constant 0.000000e+00 : f32
      %40 = vector.broadcast %cst_47 : f32 to vector<1x32xf32>
      %41 = arith.subf %40, %39 : vector<1x32xf32>
      %42 = math.exp %41 : vector<1x32xf32>
      %cst_48 = arith.constant 1.000000e+00 : f32
      %43 = vector.broadcast %cst_48 : f32 to vector<1x32xf32>
      %44 = arith.addf %43, %42 : vector<1x32xf32>
      %45 = tpu.reciprocal %44 : vector<1x32xf32> -> vector<1x32xf32>
      %c0_49 = arith.constant 0 : index
      %c0_50 = arith.constant 0 : index
      %c0_51 = arith.constant 0 : index
      %46 = vector.load %arg7[%c0_49, %c0_50, %c0_51] : memref<1x1x32xf32, #tpu.memory_space<vmem>>, vector<1x1x32xf32>
      %47 = vector.shape_cast %46 : vector<1x1x32xf32> to vector<1x32xf32>
      %48 = vector.shape_cast %45 : vector<1x32xf32> to vector<1x1x32xf32>
      tpu.vector_store %arg7[%c0_49, %c0_50, %c0_51], %48 {strides = array<i32>} : memref<1x1x32xf32, #tpu.memory_space<vmem>>, vector<1x1x32xf32>,
    } else {
    }
    return
  }
  func.func @transform_0(%arg0: i32, %arg1: i32) -> (i32, i32, i32) {
    %c0_i32 = arith.constant 0 : i32
    %c0_i32_0 = arith.constant 0 : i32
    return %arg0, %c0_i32, %arg1 : i32, i32, i32
  }
  func.func @transform_1(%arg0: i32, %arg1: i32) -> (i32, i32) {
    %c0_i32 = arith.constant 0 : i32
    %c0_i32_0 = arith.constant 0 : i32
    %c0_i32_1 = arith.constant 0 : i32
    return %c0_i32, %c0_i32_0 : i32, i32
  }
  func.func @transform_2(%arg0: i32, %arg1: i32) -> (i32, i32) {
    %c0_i32 = arith.constant 0 : i32
    %c0_i32_0 = arith.constant 0 : i32
    %c0_i32_1 = arith.constant 0 : i32
    return %c0_i32, %c0_i32_0 : i32, i32
  }
  func.func @transform_3(%arg0: i32, %arg1: i32) -> (i32, i32) {
    %c0_i32 = arith.constant 0 : i32
    %c0_i32_0 = arith.constant 0 : i32
    %c0_i32_1 = arith.constant 0 : i32
    return %c0_i32, %c0_i32_0 : i32, i32
  }
  func.func @transform_4(%arg0: i32, %arg1: i32) -> (i32, i32) {
    %c0_i32 = arith.constant 0 : i32
    %c0_i32_0 = arith.constant 0 : i32
    %c0_i32_1 = arith.constant 0 : i32
    return %c0_i32, %c0_i32_0 : i32, i32
  }
  func.func @transform_5(%arg0: i32, %arg1: i32) -> (i32, i32, i32) {
    %c0_i32 = arith.constant 0 : i32
    %c0_i32_0 = arith.constant 0 : i32
    %c0_i32_1 = arith.constant 0 : i32
    return %arg0, %c0_i32, %c0_i32_0 : i32, i32, i32
  }
}

</mosaic_0001>

<llo_original>
// kernel: tpu_custom_call.1
$region0: #{tpu_custom_call.1}
  #allocation0 [shape = 'u32[]', space=smem, size = 0x4, offset = 0x4, fixed_abs, tag = 'smem constant byte address 0x4 - core index']
  #allocation1 [shape = 'u32[144,128]{1,0:T(1,128)}', space=vmem, size = 0x12000, scoped, tag = 'internal scratch']
  #allocation2 [shape = 'f32[1,32,256]{2,1,0:T(8,128)}', space=vmem, size = 0x8000, scoped, tag = 'scratch operand']
  #allocation3 [shape = 'f32[1,32,256]{2,1,0:T(8,128)}', space=vmem, size = 0x8000, scoped, tag = 'scratch operand']
  %s0 = inlined_call_operand.hbm [shape: f32[2,32,256], index: 0, kind: input, shape index: {}]
  %s1 = inlined_call_operand.vmem [shape: f32[32,2], index: 1, kind: input, shape index: {}]
  %s2 = inlined_call_operand.vmem [shape: f32[1,2], index: 2, kind: input, shape index: {}]
  %s3 = inlined_call_operand.vmem [shape: f32[2,32], index: 3, kind: input, shape index: {}]
  %s4 = inlined_call_operand.vmem [shape: f32[1,32], index: 4, kind: input, shape index: {}]
  %s5 = inlined_call_operand.hbm [shape: f32[2,1,32], index: 5, kind: output, shape index: {}]
  %s6 = sld [smem:[#allocation0]]
  $region65: #{tpu_custom_call.1} parent=0
    _
  %s8 = ssub.s32 1, %s6
  %s9 = scalar_select 0, %s8, %s6
  $region1: #{tpu_custom_call.1} parent=0
    #allocation4 [shape = 'u8[65536]{0}', space=vmem, size = 0x10000, scoped, tag = 'input window, operand 0']
    #allocation5 [shape = 's32[2]{0}', space=sflag, size = 0x8, scoped, tag = 'scoped memory for tpu_custom_call.1']
    #allocation6 [shape = 's32[2]{0}', space=sflag, size = 0x8, scoped, tag = 'scoped memory for tpu_custom_call.1']
    #allocation7 [shape = 'u8[1024]{0}', space=vmem, size = 0x400, scoped, tag = 'output window, operand 0']
    %10 = vsyncpa [#allocation5], 0
    %s11 = scalar_lea.sflag [#allocation5], 1
    %12 = vsyncpa %s11, 0
    %13 = vsyncpa [#allocation6], 0
    %s14 = scalar_lea.sflag [#allocation6], 1
    %15 = vsyncpa %s14, 0
    loop: start=0, step=1, limit=4
    $region2: #{tpu_custom_call.1} parent=1 // loop_pre_header
      _
    $region3: #{tpu_custom_call.1} parent=1 // loop_header
      %s17 = sphi 0, %s21
      %p18 = scmp.ge.s32.totalorder %s17, 4
      %s24 = sphi 0, %s36
      %s25 = sphi 0, %s32
      %s26 = sphi 0, %s24
      %s27 = sphi 0, %s25
      %s28 = sphi 0, %s26
      %s29 = sphi 0, %s27
      %s41 = sphi 0, %s43
      %s44 = sphi 0, %s41
      %s45 = sphi 0, %s44
      %s61 = sphi 0, %s45
      %s65 = sphi 0, %s65
      %s67 = sphi 0, %s65
      %s68 = sphi 0, %s67
      %s82 = sphi 0, %s68
      %s86 = sphi 0, %s86
      %s88 = sphi 0, %s86
      %s89 = sphi 0, %s88
      %s103 = sphi 0, %s89
      %s107 = sphi 0, %s107
      %s109 = sphi 0, %s107
      %s110 = sphi 0, %s109
      %s124 = sphi 0, %s110
      %s128 = sphi 0, %s128
      %s130 = sphi 0, %s128
      %s131 = sphi 0, %s130
      %s145 = sphi 0, %s131
      %s151 = sphi 0, %s153
      %s154 = sphi 0, %s151
      %s155 = sphi 0, %s154
      %s171 = sphi 0, %s155
    $region4: #{tpu_custom_call.1} parent=1 // loop_header_branch
      %20 = sbr.rel (%p18) target = $region8
    $region5: #{tpu_custom_call.1} parent=1 // loop_body
      %s22 = ssub.s32 %s17, 1
      %s23 = ssub.s32 %s17, 2
      %s30 = sadd.s32 1, %s25
      %p31 = scmp.ge.s32.totalorder %s30, 1
      %s32 = scalar_select %p31, 0, %s30
      %s33 = sadd.s32 1, %s24
      %s34 = scalar_select %p31, %s33, %s24
      %p35 = scmp.ge.s32.totalorder %s34, 2
      %s36 = scalar_select %p35, 0, %s34
      %s37 = ssub.s32 %s24, %s36
      %s38 = ssub.s32 %s25, %s32
      %s39 = sor.u32 %s37, %s38
      %p40 = scmp.eq.s32.totalorder %s39, 0
      %s42 = sadd.s32 %s41, 1
      %s43 = scalar_select %p40, %s41, %s42
      %p46 = pneg %p40
      %p47 = scmp.eq.s32.totalorder %s17, 1
      %p48 = por %p46, %p47
      %p49 = scmp.ne.s32.totalorder %s41, %s44
      %p50 = scmp.eq.s32.totalorder %s17, 0
      %p51 = por %p49, %p50
      %p52 = scmp.ne.s32.totalorder %s41, %s44
      %p53 = scmp.eq.s32.totalorder %s22, 1
      %p54 = por %p52, %p53
      %p55 = scmp.ne.s32.totalorder %s44, %s45
      %p56 = scmp.eq.s32.totalorder %s22, 0
      %p57 = por %p55, %p56
      %p58 = scmp.ne.s32.totalorder %s44, %s45
      %p59 = scmp.eq.s32.totalorder %s23, 1
      %p60 = por %p58, %p59
      %p62 = scmp.ne.s32.totalorder %s45, %s61
      %p63 = scmp.eq.s32.totalorder %s23, 0
      %p64 = por %p62, %p63
      %s66 = sadd.s32 %s65, 1
      %p69 = scmp.eq.s32.totalorder %s17, 1
      %p70 = scmp.ne.s32.totalorder %s65, %s67
      %p71 = scmp.eq.s32.totalorder %s17, 0
      %p72 = por %p70, %p71
      %p73 = scmp.ne.s32.totalorder %s65, %s67
      %p74 = scmp.eq.s32.totalorder %s22, 1
      %p75 = por %p73, %p74
      %p76 = scmp.ne.s32.totalorder %s67, %s68
      %p77 = scmp.eq.s32.totalorder %s22, 0
      %p78 = por %p76, %p77
      %p79 = scmp.ne.s32.totalorder %s67, %s68
      %p80 = scmp.eq.s32.totalorder %s23, 1
      %p81 = por %p79, %p80
      %p83 = scmp.ne.s32.totalorder %s68, %s82
      %p84 = scmp.eq.s32.totalorder %s23, 0
      %p85 = por %p83, %p84
      %s87 = sadd.s32 %s86, 1
      %p90 = scmp.eq.s32.totalorder %s17, 1
      %p91 = scmp.ne.s32.totalorder %s86, %s88
      %p92 = scmp.eq.s32.totalorder %s17, 0
      %p93 = por %p91, %p92
      %p94 = scmp.ne.s32.totalorder %s86, %s88
      %p95 = scmp.eq.s32.totalorder %s22, 1
      %p96 = por %p94, %p95
      %p97 = scmp.ne.s32.totalorder %s88, %s89
      %p98 = scmp.eq.s32.totalorder %s22, 0
      %p99 = por %p97, %p98
      %p100 = scmp.ne.s32.totalorder %s88, %s89
      %p101 = scmp.eq.s32.totalorder %s23, 1
      %p102 = por %p100, %p101
      %p104 = scmp.ne.s32.totalorder %s89, %s103
      %p105 = scmp.eq.s32.totalorder %s23, 0
      %p106 = por %p104, %p105
      %s108 = sadd.s32 %s107, 1
      %p111 = scmp.eq.s32.totalorder %s17, 1
      %p112 = scmp.ne.s32.totalorder %s107, %s109
      %p113 = scmp.eq.s32.totalorder %s17, 0
      %p114 = por %p112, %p113
      %p115 = scmp.ne.s32.totalorder %s107, %s109
      %p116 = scmp.eq.s32.totalorder %s22, 1
      %p117 = por %p115, %p116
      %p118 = scmp.ne.s32.totalorder %s109, %s110
      %p119 = scmp.eq.s32.totalorder %s22, 0
      %p120 = por %p118, %p119
      %p121 = scmp.ne.s32.totalorder %s109, %s110
      %p122 = scmp.eq.s32.totalorder %s23, 1
      %p123 = por %p121, %p122
      %p125 = scmp.ne.s32.totalorder %s110, %s124
      %p126 = scmp.eq.s32.totalorder %s23, 0
      %p127 = por %p125, %p126
      %s129 = sadd.s32 %s128, 1
      %p132 = scmp.eq.s32.totalorder %s17, 1
      %p133 = scmp.ne.s32.totalorder %s128, %s130
      %p134 = scmp.eq.s32.totalorder %s17, 0
      %p135 = por %p133, %p134
      %p136 = scmp.ne.s32.totalorder %s128, %s130
      %p137 = scmp.eq.s32.totalorder %s22, 1
      %p138 = por %p136, %p137
      %p139 = scmp.ne.s32.totalorder %s130, %s131
      %p140 = scmp.eq.s32.totalorder %s22, 0
      %p141 = por %p139, %p140
      %p142 = scmp.ne.s32.totalorder %s130, %s131
      %p143 = scmp.eq.s32.totalorder %s23, 1
      %p144 = por %p142, %p143
      %p146 = scmp.ne.s32.totalorder %s131, %s145
      %p147 = scmp.eq.s32.totalorder %s23, 0
      %p148 = por %p146, %p147
      %s149 = ssub.s32 %s24, %s36
      %p150 = scmp.eq.s32.totalorder %s149, 0
      %s152 = sadd.s32 %s151, 1
      %s153 = scalar_select %p150, %s151, %s152
      %p156 = pneg %p150
      %p157 = scmp.eq.s32.totalorder %s17, 1
      %p158 = por %p156, %p157
      %p159 = scmp.ne.s32.totalorder %s151, %s154
      %p160 = scmp.eq.s32.totalorder %s17, 0
      %p161 = por %p159, %p160
      %p162 = scmp.ne.s32.totalorder %s151, %s154
      %p163 = scmp.eq.s32.totalorder %s22, 1
      %p164 = por %p162, %p163
      %p165 = scmp.ne.s32.totalorder %s154, %s155
      %p166 = scmp.eq.s32.totalorder %s22, 0
      %p167 = por %p165, %p166
      %p168 = scmp.ne.s32.totalorder %s154, %s155
      %p169 = scmp.eq.s32.totalorder %s23, 1
      %p170 = por %p168, %p169
      %p172 = scmp.ne.s32.totalorder %s155, %s171
      %p173 = scmp.eq.s32.totalorder %s23, 0
      %p174 = por %p172, %p173
      %p175 = scmp.le.s32.totalorder 1, %s17
      %p176 = scmp.lt.s32.totalorder %s17, 3
      %p177 = pnand %p175, %p176
      %p178 = pneg %p177
      // Predicated region
      $region9: #{tpu_custom_call.1} parent=5 // pred_check
        _
      $region10: #{tpu_custom_call.1} parent=5 // pred_check_branch
        %180 = sbr.rel (%p177) target = $region12
      $region11: #{tpu_custom_call.1} parent=5 // pred_region
        %s181 = ssub.s32 %s17, 1
        // Predicated region
        $region13: #{tpu_custom_call.1} parent=11 // pred_check
          %p182 = pneg %p78
        $region14: #{tpu_custom_call.1} parent=11 // pred_check_branch
          %184 = sbr.rel (%p182) target = $region16
        $region15: #{tpu_custom_call.1} parent=11 // pred_region
          _
        $region16: #{tpu_custom_call.1} parent=11 // pred_fallthru
          _
        // Predicated region
        $region17: #{tpu_custom_call.1} parent=11 // pred_check
          %p185 = pneg %p99
        $region18: #{tpu_custom_call.1} parent=11 // pred_check_branch
          %187 = sbr.rel (%p185) target = $region20
        $region19: #{tpu_custom_call.1} parent=11 // pred_region
          _
        $region20: #{tpu_custom_call.1} parent=11 // pred_fallthru
          _
        // Predicated region
        $region21: #{tpu_custom_call.1} parent=11 // pred_check
          %p188 = pneg %p120
        $region22: #{tpu_custom_call.1} parent=11 // pred_check_branch
          %190 = sbr.rel (%p188) target = $region24
        $region23: #{tpu_custom_call.1} parent=11 // pred_region
          _
        $region24: #{tpu_custom_call.1} parent=11 // pred_fallthru
          _
        // Predicated region
        $region25: #{tpu_custom_call.1} parent=11 // pred_check
          %p191 = pneg %p141
        $region26: #{tpu_custom_call.1} parent=11 // pred_check_branch
          %193 = sbr.rel (%p191) target = $region28
        $region27: #{tpu_custom_call.1} parent=11 // pred_region
          _
        $region28: #{tpu_custom_call.1} parent=11 // pred_fallthru
          _
      $region12: #{tpu_custom_call.1} parent=5 // pred_fallthru
        _
      %p194 = scmp.lt.s32.totalorder %s17, 2
      // Predicated region
      $region29: #{tpu_custom_call.1} parent=5 // pred_check
        %p195 = pneg %p194
      $region30: #{tpu_custom_call.1} parent=5 // pred_check_branch
        %197 = sbr.rel (%p195) target = $region32
      $region31: #{tpu_custom_call.1} parent=5 // pred_region
        // Predicated region
        $region33: #{tpu_custom_call.1} parent=31 // pred_check
          %p198 = pneg %p51
        $region34: #{tpu_custom_call.1} parent=31 // pred_check_branch
          %200 = sbr.rel (%p198) target = $region36
        $region35: #{tpu_custom_call.1} parent=31 // pred_region
          %s201 = sand.u32 %s41, 1
          %s202 = scalar_lea.sflag [#allocation5], %s201
          %s203 = sand.u32 %s41, 1
          %s204 = smul.addr %s203, 64
          %s205 = scalar_lea.vmem [#allocation4], %s204
          %s206 = smul.u32 2, %s25
          %s208 = ssub.s32 1024, 1024
          %209 = vsyncadd %s202, %s208
          %s210 = smul.addr %s24, 8
          %s211 = sadd.s32 %s206, %s210
          %s212 = smul.addr %s211, 128
          %s213 = scalar_lea.hbm %s0, %s212
          %s214 = sshll.u32 %s205, 4
          %s215 = int_to_ptr.vmem [resolvable:$true] %s214
          %220 = dma.hbm_to_vmem [thread:$0]  %s213, 1024, %s215, %s202, 256, 256, 16
        $region36: #{tpu_custom_call.1} parent=31 // pred_fallthru
          _
      $region32: #{tpu_custom_call.1} parent=5 // pred_fallthru
        _
      %p221 = scmp.le.s32.totalorder 1, %s17
      %p222 = scmp.lt.s32.totalorder %s17, 3
      %p223 = pnand %p221, %p222
      %p224 = pneg %p223
      // Predicated region
      $region37: #{tpu_custom_call.1} parent=5 // pred_check
        _
      $region38: #{tpu_custom_call.1} parent=5 // pred_check_branch
        %226 = sbr.rel (%p223) target = $region40
      $region39: #{tpu_custom_call.1} parent=5 // pred_region
        %s227 = ssub.s32 %s17, 1
        %s228 = sand.u32 %s44, 1
        %s229 = scalar_lea.sflag [#allocation5], %s228
        %s230 = sand.u32 %s44, 1
        %s231 = smul.addr %s230, 64
        %s232 = scalar_lea.vmem [#allocation4], %s231
        // Predicated region
        $region41: #{tpu_custom_call.1} parent=39 // pred_check
          %p233 = pneg %p57
        $region42: #{tpu_custom_call.1} parent=39 // pred_check_branch
          %235 = sbr.rel (%p233) target = $region44
        $region43: #{tpu_custom_call.1} parent=39 // pred_region
          %236 = dma.done %s229, 1024
        $region44: #{tpu_custom_call.1} parent=39 // pred_fallthru
          _
        %s237 = sand.u32 %s44, 1
        %s238 = scalar_lea.sflag [#allocation5], %s237
        %s239 = sand.u32 %s44, 1
        %s240 = smul.addr %s239, 64
        %s241 = scalar_lea.vmem [#allocation4], %s240
        %p242 = pneg %p57
        %p243 = pneg %p54
        %p244 = pneg %p78
        %p245 = pneg %p75
        %p246 = pneg %p99
        %p247 = pneg %p96
        %p248 = pneg %p120
        %p249 = pneg %p117
        %p250 = pneg %p141
        %p251 = pneg %p138
        %p252 = pneg %p167
        %p253 = pneg %p164
        %s254 = sand.u32 %s154, 1
        %s255 = scalar_lea.sflag [#allocation6], %s254
        %s256 = sand.u32 %s154, 1
        %s257 = scalar_lea.vmem [#allocation7], %s256
        %s258 = smul.u32 2, %s27
        %p259 = scmp.eq.s32.totalorder %s27, 0
        // Predicated region
        $region45: #{tpu_custom_call.1} parent=39 // pred_check
          %p260 = pneg %p259
        $region46: #{tpu_custom_call.1} parent=39 // pred_check_branch
          %262 = sbr.rel (%p260) target = $region48
        $region47: #{tpu_custom_call.1} parent=39 // pred_region
          %263 = vst [vmem:[#allocation2] sm:$0xff] 0.0
          %264 = vst [vmem:[#allocation2 + $0x8] sm:$0xff] 0.0
          %265 = vst [vmem:[#allocation2 + $0x10] sm:$0xff] 0.0
          %266 = vst [vmem:[#allocation2 + $0x18] sm:$0xff] 0.0
          %267 = vst [vmem:[#allocation2 + $0x20] sm:$0xff] 0.0
          %268 = vst [vmem:[#allocation2 + $0x28] sm:$0xff] 0.0
          %269 = vst [vmem:[#allocation2 + $0x30] sm:$0xff] 0.0
          %270 = vst [vmem:[#allocation2 + $0x38] sm:$0xff] 0.0
          %271 = vst [vmem:[#allocation3] sm:$0xff] -inf
          %272 = vst [vmem:[#allocation3 + $0x8] sm:$0xff] -inf
          %273 = vst [vmem:[#allocation3 + $0x10] sm:$0xff] -inf
          %274 = vst [vmem:[#allocation3 + $0x18] sm:$0xff] -inf
          %275 = vst [vmem:[#allocation3 + $0x20] sm:$0xff] -inf
          %276 = vst [vmem:[#allocation3 + $0x28] sm:$0xff] -inf
          %277 = vst [vmem:[#allocation3 + $0x30] sm:$0xff] -inf
          %278 = vst [vmem:[#allocation3 + $0x38] sm:$0xff] -inf
        $region48: #{tpu_custom_call.1} parent=39 // pred_fallthru
          _
        %v279 = vld [vmem:[%s232] sm:$0xff]
        %v280 = vld [vmem:[%s232 + $0x8] sm:$0xff]
        %v281 = vld [vmem:[%s232 + $0x10] sm:$0xff]
        %v282 = vld [vmem:[%s232 + $0x18] sm:$0xff]
        %v283 = vld [vmem:[%s232 + $0x20] sm:$0xff]
        %v284 = vld [vmem:[%s232 + $0x28] sm:$0xff]
        %v285 = vld [vmem:[%s232 + $0x30] sm:$0xff]
        %v286 = vld [vmem:[%s232 + $0x38] sm:$0xff]
        %v287 = vld [vmem:[#allocation2] sm:$0xff]
        %v288 = vld [vmem:[#allocation2 + $0x8] sm:$0xff]
        %v289 = vld [vmem:[#allocation2 + $0x10] sm:$0xff]
        %v290 = vld [vmem:[#allocation2 + $0x18] sm:$0xff]
        %v291 = vld [vmem:[#allocation2 + $0x20] sm:$0xff]
        %v292 = vld [vmem:[#allocation2 + $0x28] sm:$0xff]
        %v293 = vld [vmem:[#allocation2 + $0x30] sm:$0xff]
        %v294 = vld [vmem:[#allocation2 + $0x38] sm:$0xff]
        %v295 = vadd.f32 %v287, %v279
        %v296 = vadd.f32 %v288, %v280
        %v297 = vadd.f32 %v289, %v281
        %v298 = vadd.f32 %v290, %v282
        %v299 = vadd.f32 %v291, %v283
        %v300 = vadd.f32 %v292, %v284
        %v301 = vadd.f32 %v293, %v285
        %v302 = vadd.f32 %v294, %v286
        %303 = vst [vmem:[#allocation2] sm:$0xff] %v295
        %304 = vst [vmem:[#allocation2 + $0x8] sm:$0xff] %v296
        %305 = vst [vmem:[#allocation2 + $0x10] sm:$0xff] %v297
        %306 = vst [vmem:[#allocation2 + $0x18] sm:$0xff] %v298
        %307 = vst [vmem:[#allocation2 + $0x20] sm:$0xff] %v299
        %308 = vst [vmem:[#allocation2 + $0x28] sm:$0xff] %v300
        %309 = vst [vmem:[#allocation2 + $0x30] sm:$0xff] %v301
        %310 = vst [vmem:[#allocation2 + $0x38] sm:$0xff] %v302
        %v311 = vld [vmem:[#allocation3] sm:$0xff]
        %v312 = vld [vmem:[#allocation3 + $0x8] sm:$0xff]
        %v313 = vld [vmem:[#allocation3 + $0x10] sm:$0xff]
        %v314 = vld [vmem:[#allocation3 + $0x18] sm:$0xff]
        %v315 = vld [vmem:[#allocation3 + $0x20] sm:$0xff]
        %v316 = vld [vmem:[#allocation3 + $0x28] sm:$0xff]
        %v317 = vld [vmem:[#allocation3 + $0x30] sm:$0xff]
        %v318 = vld [vmem:[#allocation3 + $0x38] sm:$0xff]
        %v319 = vmax.f32 %v311, %v279
        %v320 = vmax.f32 %v312, %v280
        %v321 = vmax.f32 %v313, %v281
        %v322 = vmax.f32 %v314, %v282
        %v323 = vmax.f32 %v315, %v283
        %v324 = vmax.f32 %v316, %v284
        %v325 = vmax.f32 %v317, %v285
        %v326 = vmax.f32 %v318, %v286
        %327 = vst [vmem:[#allocation3] sm:$0xff] %v319
        %328 = vst [vmem:[#allocation3 + $0x8] sm:$0xff] %v320
        %329 = vst [vmem:[#allocation3 + $0x10] sm:$0xff] %v321
        %330 = vst [vmem:[#allocation3 + $0x18] sm:$0xff] %v322
        %331 = vst [vmem:[#allocation3 + $0x20] sm:$0xff] %v323
        %332 = vst [vmem:[#allocation3 + $0x28] sm:$0xff] %v324
        %333 = vst [vmem:[#allocation3 + $0x30] sm:$0xff] %v325
        %334 = vst [vmem:[#allocation3 + $0x38] sm:$0xff] %v326
        // Predicated region
        $region49: #{tpu_custom_call.1} parent=39 // pred_check
          %p335 = pneg %p259
        $region50: #{tpu_custom_call.1} parent=39 // pred_check_branch
          %337 = sbr.rel (%p335) target = $region52
        $region51: #{tpu_custom_call.1} parent=39 // pred_region
          %v338 = vld [vmem:[#allocation2] sm:$0xff]
          %v339 = vld [vmem:[#allocation2 + $0x8] sm:$0xff]
          %v340 = vld [vmem:[#allocation2 + $0x10] sm:$0xff]
          %v341 = vld [vmem:[#allocation2 + $0x18] sm:$0xff]
          %v342 = vld [vmem:[#allocation2 + $0x20] sm:$0xff]
          %v343 = vld [vmem:[#allocation2 + $0x28] sm:$0xff]
          %v344 = vld [vmem:[#allocation2 + $0x30] sm:$0xff]
          %v345 = vld [vmem:[#allocation2 + $0x38] sm:$0xff]
          %v346 = vadd.f32 %v338, %v339
          %347 = vadd.xlane.f32.xlu0 %v346
          %v348 = vpop.xlane.xlu0 %347
          %v349 = vadd.f32 %v340, %v341
          %350 = vadd.xlane.f32.xlu0 %v349
          %v351 = vpop.xlane.xlu0 %350
          %v352 = vadd.f32 %v342, %v343
          %353 = vadd.xlane.f32.xlu0 %v352
          %v354 = vpop.xlane.xlu0 %353
          %v355 = vadd.f32 %v344, %v345
          %356 = vadd.xlane.f32.xlu0 %v355
          %v357 = vpop.xlane.xlu0 %356
          %v358 = vmul.f32 %v348, 0.00390625
          %v359 = vmul.f32 %v351, 0.00390625
          %v360 = vmul.f32 %v354, 0.00390625
          %v361 = vmul.f32 %v357, 0.00390625
          %v362 = vld [vmem:[#allocation3] sm:$0xff]
          %v363 = vld [vmem:[#allocation3 + $0x8] sm:$0xff]
          %v364 = vld [vmem:[#allocation3 + $0x10] sm:$0xff]
          %v365 = vld [vmem:[#allocation3 + $0x18] sm:$0xff]
          %v366 = vld [vmem:[#allocation3 + $0x20] sm:$0xff]
          %v367 = vld [vmem:[#allocation3 + $0x28] sm:$0xff]
          %v368 = vld [vmem:[#allocation3 + $0x30] sm:$0xff]
          %v369 = vld [vmem:[#allocation3 + $0x38] sm:$0xff]
          %v370 = vmax.f32 %v362, %v363
          %371 = vmax.xlane.f32.xlu0 %v370
          %v372 = vpop.xlane.xlu0 %371
          %v373 = vmax.f32 %v364, %v365
          %374 = vmax.xlane.f32.xlu0 %v373
          %v375 = vpop.xlane.xlu0 %374
          %v376 = vmax.f32 %v366, %v367
          %377 = vmax.xlane.f32.xlu0 %v376
          %v378 = vpop.xlane.xlu0 %377
          %v379 = vmax.f32 %v368, %v369
          %380 = vmax.xlane.f32.xlu0 %v379
          %v381 = vpop.xlane.xlu0 %380
          %v382 = vld [vmem:[%s1] sm:$0xff]
          %v383 = vld [vmem:[%s1 + $0x8] sm:$0xff]
          %v384 = vld [vmem:[%s1 + $0x10] sm:$0xff]
          %v385 = vld [vmem:[%s1 + $0x18] sm:$0xff]
          %v386 = vld [vmem:[%s2] sm:$0x1]
          %v391 = vlaneseq
          %v392 = vand.u32 %v391, 127
          %v393 = vlaneseq
          %v394 = vshrl.u32 %v393, 7
          %v395 = vsub.s32 %v392, %v394
          %v396 = vrot.slane %v358, %v395
          %v397 = vadd.s32 %v392, 4294967288
          %v398 = vlaneseq
          %v399 = vshrl.u32 %v398, 7
          %v400 = vsub.s32 %v397, %v399
          %v401 = vrot.slane %v359, %v400
          %vm402 = vcmask 130112
          %v403 = vsel %vm402, %v401, %v396
          %v404 = vadd.s32 %v392, 4294967280
          %v405 = vlaneseq
          %v406 = vshrl.u32 %v405, 7
          %v407 = vsub.s32 %v404, %v406
          %v408 = vrot.slane %v360, %v407
          %vm409 = vcmask 195712
          %v410 = vsel %vm409, %v408, %v403
          %v411 = vadd.s32 %v392, 4294967272
          %v412 = vlaneseq
          %v413 = vshrl.u32 %v412, 7
          %v414 = vsub.s32 %v411, %v413
          %v415 = vrot.slane %v361, %v414
          %vm416 = vcmask 261312
          %v417 = vsel %vm416, %v415, %v410
          %vm418 = vcmask 261120
          %v419 = vsel %vm418, %v417, 0
          %421 = vmatprep.subr.mxu0 0.0
          %422 = vmatpush1.msra.mxu0 0.0
          %423 = vmatprep.subr.mxu0 0.0
          %424 = vmatpush1.msra.mxu0 0.0
          %425 = vmatprep.subr.mxu0 0.0
          %426 = vmatpush1.msra.mxu0 0.0
          %427 = vmatprep.subr.mxu0 0.0
          %428 = vmatpush1.msra.mxu0 0.0
          %429 = vmatprep.subr.mxu0 0.0
          %430 = vmatpush1.msra.mxu0 0.0
          %431 = vmatprep.subr.mxu0 0.0
          %432 = vmatpush1.msra.mxu0 0.0
          %433 = vmatprep.subr.mxu0 0.0
          %434 = vmatpush1.msra.mxu0 0.0
          %435 = vmatprep.subr.mxu0 0.0
          %436 = vmatpush1.msra.mxu0 0.0
          %437 = vmatprep.subr.mxu0 0.0
          %438 = vmatpush1.msra.mxu0 0.0
          %439 = vmatprep.subr.mxu0 0.0
          %440 = vmatpush1.msra.mxu0 0.0
          %441 = vmatprep.subr.mxu0 0.0
          %442 = vmatpush1.msra.mxu0 0.0
          %443 = vmatprep.subr.mxu0 0.0
          %444 = vmatpush1.msra.mxu0 0.0
          %445 = vmatprep.subr.mxu0 0.0
          %446 = vmatpush1.msra.mxu0 %v385
          %447 = vmatprep.subr.mxu0 0.0
          %448 = vmatpush1.msra.mxu0 %v384
          %449 = vmatprep.subr.mxu0 0.0
          %450 = vmatpush1.msra.mxu0 %v383
          %451 = vmatprep.subr.mxu0 0.0
          %452 = vmatpush1.msra.mxu0 %v382
          %453 = vmatprep.subr.mxu0 0.0
          %454 = vmatpush2.msra.mxu0 0.0
          %455 = vmatprep.subr.mxu0 0.0
          %456 = vmatpush2.msra.mxu0 0.0
          %457 = vmatprep.subr.mxu0 0.0
          %458 = vmatpush2.msra.mxu0 0.0
          %459 = vmatprep.subr.mxu0 0.0
          %460 = vmatpush2.msra.mxu0 0.0
          %461 = vmatprep.subr.mxu0 0.0
          %462 = vmatpush2.msra.mxu0 0.0
          %463 = vmatprep.subr.mxu0 0.0
          %464 = vmatpush2.msra.mxu0 0.0
          %465 = vmatprep.subr.mxu0 0.0
          %466 = vmatpush2.msra.mxu0 0.0
          %467 = vmatprep.subr.mxu0 0.0
          %468 = vmatpush2.msra.mxu0 0.0
          %469 = vmatprep.subr.mxu0 0.0
          %470 = vmatpush2.msra.mxu0 0.0
          %471 = vmatprep.subr.mxu0 0.0
          %472 = vmatpush2.msra.mxu0 0.0
          %473 = vmatprep.subr.mxu0 0.0
          %474 = vmatpush2.msra.mxu0 0.0
          %475 = vmatprep.subr.mxu0 0.0
          %476 = vmatpush2.msra.mxu0 0.0
          %477 = vmatprep.subr.mxu0 0.0
          %478 = vmatpush2.msra.mxu0 0.0
          %479 = vmatprep.subr.mxu0 0.0
          %480 = vmatpush2.msra.mxu0 0.0
          %481 = vmatprep.subr.mxu0 0.0
          %482 = vmatpush2.msra.mxu0 0.0
          %483 = vmatprep.subr.mxu0 0.0
          %484 = vmatpush2.msra.mxu0 0.0
          %485 = vmatprep.mubr.f32.mxu0 0.0
          %486 = vmatmul.mubr.f32.gmra.mxu0 %v419
          %v487 = vpop.f32.mrf.mxu0
          %v488 = vadd.f32 %v386, %v487
          %v489 = vpop.f32.mrf.mxu0
          %490 = vdwg.mxu0
          %v491 = vmax.f32 %v488, 0.0
          %v492 = vld [vmem:[%s3] sm:$0x3]
          %v493 = vld [vmem:[%s4] sm:$0x1]
          %vm494 = vcmask 15360
          %v496 = vsel %vm494, %v491, 0
          %vm498 = vcmask 1041408
          %v500 = vsel %vm498, %v492, 0
          %502 = vmatprep.subr.mxu0 0.0
          %503 = vmatpush1.msra.mxu0 0.0
          %504 = vmatprep.subr.mxu0 0.0
          %505 = vmatpush1.msra.mxu0 0.0
          %506 = vmatprep.subr.mxu0 0.0
          %507 = vmatpush1.msra.mxu0 0.0
          %508 = vmatprep.subr.mxu0 0.0
          %509 = vmatpush1.msra.mxu0 0.0
          %510 = vmatprep.subr.mxu0 0.0
          %511 = vmatpush1.msra.mxu0 0.0
          %512 = vmatprep.subr.mxu0 0.0
          %513 = vmatpush1.msra.mxu0 0.0
          %514 = vmatprep.subr.mxu0 0.0
          %515 = vmatpush1.msra.mxu0 0.0
          %516 = vmatprep.subr.mxu0 0.0
          %517 = vmatpush1.msra.mxu0 0.0
          %518 = vmatprep.subr.mxu0 0.0
          %519 = vmatpush1.msra.mxu0 0.0
          %520 = vmatprep.subr.mxu0 0.0
          %521 = vmatpush1.msra.mxu0 0.0
          %522 = vmatprep.subr.mxu0 0.0
          %523 = vmatpush1.msra.mxu0 0.0
          %524 = vmatprep.subr.mxu0 0.0
          %525 = vmatpush1.msra.mxu0 0.0
          %526 = vmatprep.subr.mxu0 0.0
          %527 = vmatpush1.msra.mxu0 0.0
          %528 = vmatprep.subr.mxu0 0.0
          %529 = vmatpush1.msra.mxu0 0.0
          %530 = vmatprep.subr.mxu0 0.0
          %531 = vmatpush1.msra.mxu0 0.0
          %532 = vmatprep.subr.mxu0 0.0
          %533 = vmatpush1.msra.mxu0 %v500
          %534 = vmatprep.subr.mxu0 0.0
          %535 = vmatpush2.msra.mxu0 0.0
          %536 = vmatprep.subr.mxu0 0.0
          %537 = vmatpush2.msra.mxu0 0.0
          %538 = vmatprep.subr.mxu0 0.0
          %539 = vmatpush2.msra.mxu0 0.0
          %540 = vmatprep.subr.mxu0 0.0
          %541 = vmatpush2.msra.mxu0 0.0
          %542 = vmatprep.subr.mxu0 0.0
          %543 = vmatpush2.msra.mxu0 0.0
          %544 = vmatprep.subr.mxu0 0.0
          %545 = vmatpush2.msra.mxu0 0.0
          %546 = vmatprep.subr.mxu0 0.0
          %547 = vmatpush2.msra.mxu0 0.0
          %548 = vmatprep.subr.mxu0 0.0
          %549 = vmatpush2.msra.mxu0 0.0
          %550 = vmatprep.subr.mxu0 0.0
          %551 = vmatpush2.msra.mxu0 0.0
          %552 = vmatprep.subr.mxu0 0.0
          %553 = vmatpush2.msra.mxu0 0.0
          %554 = vmatprep.subr.mxu0 0.0
          %555 = vmatpush2.msra.mxu0 0.0
          %556 = vmatprep.subr.mxu0 0.0
          %557 = vmatpush2.msra.mxu0 0.0
          %558 = vmatprep.subr.mxu0 0.0
          %559 = vmatpush2.msra.mxu0 0.0
          %560 = vmatprep.subr.mxu0 0.0
          %561 = vmatpush2.msra.mxu0 0.0
          %562 = vmatprep.subr.mxu0 0.0
          %563 = vmatpush2.msra.mxu0 0.0
          %564 = vmatprep.subr.mxu0 0.0
          %565 = vmatpush2.msra.mxu0 0.0
          %566 = vmatprep.mubr.f32.mxu0 0.0
          %567 = vmatmul.mubr.f32.gmra.mxu0 %v496
          %v568 = vpop.f32.mrf.mxu0
          %v569 = vadd.f32 %v493, %v568
          %v570 = vpop.f32.mrf.mxu0
          %571 = vdwg.mxu0
          %v576 = vlaneseq
          %v577 = vshrl.u32 %v576, 7
          %v578 = vsub.s32 %v392, %v577
          %v579 = vrot.slane %v372, %v578
          %v580 = vlaneseq
          %v581 = vshrl.u32 %v580, 7
          %v582 = vsub.s32 %v397, %v581
          %v583 = vrot.slane %v375, %v582
          %v584 = vsel %vm402, %v583, %v579
          %v585 = vlaneseq
          %v586 = vshrl.u32 %v585, 7
          %v587 = vsub.s32 %v404, %v586
          %v588 = vrot.slane %v378, %v587
          %v589 = vsel %vm409, %v588, %v584
          %v590 = vlaneseq
          %v591 = vshrl.u32 %v590, 7
          %v592 = vsub.s32 %v411, %v591
          %v593 = vrot.slane %v381, %v592
          %v594 = vsel %vm416, %v593, %v589
          %v595 = vsel %vm418, %v594, 0
          %597 = vmatprep.subr.mxu0 0.0
          %598 = vmatpush1.msra.mxu0 0.0
          %599 = vmatprep.subr.mxu0 0.0
          %600 = vmatpush1.msra.mxu0 0.0
          %601 = vmatprep.subr.mxu0 0.0
          %602 = vmatpush1.msra.mxu0 0.0
          %603 = vmatprep.subr.mxu0 0.0
          %604 = vmatpush1.msra.mxu0 0.0
          %605 = vmatprep.subr.mxu0 0.0
          %606 = vmatpush1.msra.mxu0 0.0
          %607 = vmatprep.subr.mxu0 0.0
          %608 = vmatpush1.msra.mxu0 0.0
          %609 = vmatprep.subr.mxu0 0.0
          %610 = vmatpush1.msra.mxu0 0.0
          %611 = vmatprep.subr.mxu0 0.0
          %612 = vmatpush1.msra.mxu0 0.0
          %613 = vmatprep.subr.mxu0 0.0
          %614 = vmatpush1.msra.mxu0 0.0
          %615 = vmatprep.subr.mxu0 0.0
          %616 = vmatpush1.msra.mxu0 0.0
          %617 = vmatprep.subr.mxu0 0.0
          %618 = vmatpush1.msra.mxu0 0.0
          %619 = vmatprep.subr.mxu0 0.0
          %620 = vmatpush1.msra.mxu0 0.0
          %621 = vmatprep.subr.mxu0 0.0
          %622 = vmatpush1.msra.mxu0 %v385
          %623 = vmatprep.subr.mxu0 0.0
          %624 = vmatpush1.msra.mxu0 %v384
          %625 = vmatprep.subr.mxu0 0.0
          %626 = vmatpush1.msra.mxu0 %v383
          %627 = vmatprep.subr.mxu0 0.0
          %628 = vmatpush1.msra.mxu0 %v382
          %629 = vmatprep.subr.mxu0 0.0
          %630 = vmatpush2.msra.mxu0 0.0
          %631 = vmatprep.subr.mxu0 0.0
          %632 = vmatpush2.msra.mxu0 0.0
          %633 = vmatprep.subr.mxu0 0.0
          %634 = vmatpush2.msra.mxu0 0.0
          %635 = vmatprep.subr.mxu0 0.0
          %636 = vmatpush2.msra.mxu0 0.0
          %637 = vmatprep.subr.mxu0 0.0
          %638 = vmatpush2.msra.mxu0 0.0
          %639 = vmatprep.subr.mxu0 0.0
          %640 = vmatpush2.msra.mxu0 0.0
          %641 = vmatprep.subr.mxu0 0.0
          %642 = vmatpush2.msra.mxu0 0.0
          %643 = vmatprep.subr.mxu0 0.0
          %644 = vmatpush2.msra.mxu0 0.0
          %645 = vmatprep.subr.mxu0 0.0
          %646 = vmatpush2.msra.mxu0 0.0
          %647 = vmatprep.subr.mxu0 0.0
          %648 = vmatpush2.msra.mxu0 0.0
          %649 = vmatprep.subr.mxu0 0.0
          %650 = vmatpush2.msra.mxu0 0.0
          %651 = vmatprep.subr.mxu0 0.0
          %652 = vmatpush2.msra.mxu0 0.0
          %653 = vmatprep.subr.mxu0 0.0
          %654 = vmatpush2.msra.mxu0 0.0
          %655 = vmatprep.subr.mxu0 0.0
          %656 = vmatpush2.msra.mxu0 0.0
          %657 = vmatprep.subr.mxu0 0.0
          %658 = vmatpush2.msra.mxu0 0.0
          %659 = vmatprep.subr.mxu0 0.0
          %660 = vmatpush2.msra.mxu0 0.0
          %661 = vmatprep.mubr.f32.mxu0 0.0
          %662 = vmatmul.mubr.f32.gmra.mxu0 %v595
          %v663 = vpop.f32.mrf.mxu0
          %v664 = vadd.f32 %v386, %v663
          %v665 = vpop.f32.mrf.mxu0
          %666 = vdwg.mxu0
          %v667 = vmax.f32 %v664, 0.0
          %v669 = vsel %vm494, %v667, 0
          %671 = vmatprep.subr.mxu0 0.0
          %672 = vmatpush1.msra.mxu0 0.0
          %673 = vmatprep.subr.mxu0 0.0
          %674 = vmatpush1.msra.mxu0 0.0
          %675 = vmatprep.subr.mxu0 0.0
          %676 = vmatpush1.msra.mxu0 0.0
          %677 = vmatprep.subr.mxu0 0.0
          %678 = vmatpush1.msra.mxu0 0.0
          %679 = vmatprep.subr.mxu0 0.0
          %680 = vmatpush1.msra.mxu0 0.0
          %681 = vmatprep.subr.mxu0 0.0
          %682 = vmatpush1.msra.mxu0 0.0
          %683 = vmatprep.subr.mxu0 0.0
          %684 = vmatpush1.msra.mxu0 0.0
          %685 = vmatprep.subr.mxu0 0.0
          %686 = vmatpush1.msra.mxu0 0.0
          %687 = vmatprep.subr.mxu0 0.0
          %688 = vmatpush1.msra.mxu0 0.0
          %689 = vmatprep.subr.mxu0 0.0
          %690 = vmatpush1.msra.mxu0 0.0
          %691 = vmatprep.subr.mxu0 0.0
          %692 = vmatpush1.msra.mxu0 0.0
          %693 = vmatprep.subr.mxu0 0.0
          %694 = vmatpush1.msra.mxu0 0.0
          %695 = vmatprep.subr.mxu0 0.0
          %696 = vmatpush1.msra.mxu0 0.0
          %697 = vmatprep.subr.mxu0 0.0
          %698 = vmatpush1.msra.mxu0 0.0
          %699 = vmatprep.subr.mxu0 0.0
          %700 = vmatpush1.msra.mxu0 0.0
          %701 = vmatprep.subr.mxu0 0.0
          %702 = vmatpush1.msra.mxu0 %v500
          %703 = vmatprep.subr.mxu0 0.0
          %704 = vmatpush2.msra.mxu0 0.0
          %705 = vmatprep.subr.mxu0 0.0
          %706 = vmatpush2.msra.mxu0 0.0
          %707 = vmatprep.subr.mxu0 0.0
          %708 = vmatpush2.msra.mxu0 0.0
          %709 = vmatprep.subr.mxu0 0.0
          %710 = vmatpush2.msra.mxu0 0.0
          %711 = vmatprep.subr.mxu0 0.0
          %712 = vmatpush2.msra.mxu0 0.0
          %713 = vmatprep.subr.mxu0 0.0
          %714 = vmatpush2.msra.mxu0 0.0
          %715 = vmatprep.subr.mxu0 0.0
          %716 = vmatpush2.msra.mxu0 0.0
          %717 = vmatprep.subr.mxu0 0.0
          %718 = vmatpush2.msra.mxu0 0.0
          %719 = vmatprep.subr.mxu0 0.0
          %720 = vmatpush2.msra.mxu0 0.0
          %721 = vmatprep.subr.mxu0 0.0
          %722 = vmatpush2.msra.mxu0 0.0
          %723 = vmatprep.subr.mxu0 0.0
          %724 = vmatpush2.msra.mxu0 0.0
          %725 = vmatprep.subr.mxu0 0.0
          %726 = vmatpush2.msra.mxu0 0.0
          %727 = vmatprep.subr.mxu0 0.0
          %728 = vmatpush2.msra.mxu0 0.0
          %729 = vmatprep.subr.mxu0 0.0
          %730 = vmatpush2.msra.mxu0 0.0
          %731 = vmatprep.subr.mxu0 0.0
          %732 = vmatpush2.msra.mxu0 0.0
          %733 = vmatprep.subr.mxu0 0.0
          %734 = vmatpush2.msra.mxu0 0.0
          %735 = vmatprep.mubr.f32.mxu0 0.0
          %736 = vmatmul.mubr.f32.gmra.mxu0 %v669
          %v737 = vpop.f32.mrf.mxu0
          %v738 = vadd.f32 %v493, %v737
          %v739 = vpop.f32.mrf.mxu0
          %740 = vdwg.mxu0
          %v741 = vadd.f32 %v569, %v738
          %v742 = vsub.f32 0.0, %v741
          %v743 = vmul.f32 %v742, 1.442695
          %v744 = vpow.pop %v743
          %v745 = vadd.f32 %v744, 1.0
          %v746 = vrcp.pop %v745
          %vm747 = vcmask 253952
          %748 = vst.msk [vmem:[%s257] sm:$0x1] %vm747, %v746
        $region52: #{tpu_custom_call.1} parent=39 // pred_fallthru
          _
        %s749 = sand.u32 %s154, 1
        %s750 = scalar_lea.sflag [#allocation6], %s749
        %s751 = sand.u32 %s154, 1
        %s752 = scalar_lea.vmem [#allocation7], %s751
        // Predicated region
        $region53: #{tpu_custom_call.1} parent=39 // pred_check
          %p753 = pneg %p164
        $region54: #{tpu_custom_call.1} parent=39 // pred_check_branch
          %755 = sbr.rel (%p753) target = $region56
        $region55: #{tpu_custom_call.1} parent=39 // pred_region
          %s757 = ssub.s32 16, 16
          %758 = vsyncadd %s750, %s757
          %s759 = smul.addr %s26, 16
          %s760 = scalar_lea.hbm %s5, %s759
          %s762 = sshll.u32 %s752, 4
          %s763 = int_to_ptr.vmem [resolvable:$true] %s762
          %765 = dma.vmem_to_hbm [thread:$0]  %s763, 16, %s760, %s750
        $region56: #{tpu_custom_call.1} parent=39 // pred_fallthru
          _
      $region40: #{tpu_custom_call.1} parent=5 // pred_fallthru
        _
      %p766 = scmp.le.s32.totalorder 2, %s17
      // Predicated region
      $region57: #{tpu_custom_call.1} parent=5 // pred_check
        %p767 = pneg %p766
      $region58: #{tpu_custom_call.1} parent=5 // pred_check_branch
        %769 = sbr.rel (%p767) target = $region60
      $region59: #{tpu_custom_call.1} parent=5 // pred_region
        %s770 = ssub.s32 %s17, 2
        // Predicated region
        $region61: #{tpu_custom_call.1} parent=59 // pred_check
          %p771 = pneg %p170
        $region62: #{tpu_custom_call.1} parent=59 // pred_check_branch
          %773 = sbr.rel (%p771) target = $region64
        $region63: #{tpu_custom_call.1} parent=59 // pred_region
          %s774 = sand.u32 %s155, 1
          %s775 = scalar_lea.sflag [#allocation6], %s774
          %s776 = sand.u32 %s155, 1
          %s777 = scalar_lea.vmem [#allocation7], %s776
          %778 = dma.done %s775, 16
        $region64: #{tpu_custom_call.1} parent=59 // pred_fallthru
          _
      $region60: #{tpu_custom_call.1} parent=5 // pred_fallthru
        _
    $region6: #{tpu_custom_call.1} parent=1 // loop_footer
      %s21 = sadd.s32 1, %s17
    $region7: #{tpu_custom_call.1} parent=1 // loop_footer_branch
      %16 = sbr.rel target = $region3
    $region8: #{tpu_custom_call.1} parent=1 // loop_exit
      _
    %779 = vsyncpa [#allocation5], 1
    %s780 = scalar_lea.sflag [#allocation5], 1
    %781 = vsyncpa %s780, 1
    %782 = vsyncpa [#allocation6], 1
    %s783 = scalar_lea.sflag [#allocation6], 1
    %784 = vsyncpa %s783, 1

</llo_original>
